<compile_context>
chip_gen: v5e
topology: v5e:2x2
jax: 0.10.0
libtpu: 0.0.40
codegen_flags: <defaults>
</compile_context>

<pallas_src>
import functools

import jax
import jax.numpy as jnp
from jax.experimental import pallas as pl
from jax.experimental.pallas import tpu as pltpu


def _rmse_partial_kernel(yh_ref, y_ref, out_ref, *, rows, block_rows, needs_mask):
    """Per-block partial sum of squared differences, kept lane-resident."""
    d = yh_ref[...].astype(jnp.float32) - y_ref[...].astype(jnp.float32)
    sq = d * d

    if needs_mask:
        # Last block may extend past the valid rows (cdiv grid); zero it out.
        i = pl.program_id(0)
        row_ids = jax.lax.broadcasted_iota(jnp.int32, sq.shape, 0) + i * block_rows
        sq = jnp.where(row_ids < rows, sq, jnp.float32(0.0))

    # (block_rows, 128) -> (1, 128): cross-vreg adds on the VPU plus a single
    # small sublane reduce; the expensive full reduce happens once, outside.
    out_ref[...] = jnp.sum(sq, axis=0, keepdims=True)


def rmse_loss(y_hat, y, eps=1e-8, *, tile_rows=1024, lanes=128):
    """sqrt(mean((y_hat - y)^2) + eps), matching torch RMSELoss semantics."""
    assert y_hat.shape == y.shape, "MSELoss requires matching shapes"
    n_elems = y_hat.size

    yh = jnp.ravel(y_hat)
    yy = jnp.ravel(y)

    # Only pad (with zeros, contributing 0 to the sum) when the flat length is
    # not a multiple of the 128-lane width; common DL shapes take the no-copy
    # path.  The divisor always uses the true element count, so the mean is
    # exact either way.
    # TODO(synk): handle lane-ragged tails fully in-kernel to avoid this copy.
    pad = (-n_elems) % lanes
    if pad:
        yh = jnp.pad(yh, (0, pad))
        yy = jnp.pad(yy, (0, pad))

    rows = (n_elems + pad) // lanes
    yh2 = yh.reshape(rows, lanes)
    yy2 = yy.reshape(rows, lanes)

    # Block rows: big (multiple of 8) when there is enough data, otherwise the
    # full (small) row extent so the BlockSpec matches the array dim exactly.
    if rows >= 8:
        block_rows = max(8, (min(tile_rows, rows) // 8) * 8)
    else:
        block_rows = rows
    num_blocks = pl.cdiv(rows, block_rows)
    needs_mask = (rows % block_rows) != 0

    kernel = functools.partial(
        _rmse_partial_kernel,
        rows=rows,
        block_rows=block_rows,
        needs_mask=needs_mask,
    )

    partials = pl.pallas_call(
        kernel,
        out_shape=jax.ShapeDtypeStruct((num_blocks, lanes), jnp.float32),
        grid=(num_blocks,),
        in_specs=[
            pl.BlockSpec((block_rows, lanes), lambda i: (i, 0)),
            pl.BlockSpec((block_rows, lanes), lambda i: (i, 0)),
        ],
        out_specs=pl.BlockSpec((1, lanes), lambda i: (i, 0)),
        compiler_params=pltpu.CompilerParams(
            dimension_semantics=("parallel",),
        ),
    )(yh2, yy2)

    total = jnp.sum(partials)
    return jnp.sqrt(total / jnp.float32(n_elems) + jnp.float32(eps))


if __name__ == "__main__":
    key = jax.random.PRNGKey(0)
    k1, k2, k3, k4 = jax.random.split(key, 4)

    # Primary test: shapes consistent with a regressor output (B, C, H, W).
    shape = (2, 4, 16, 16)
    y_hat = jax.random.normal(k1, shape, dtype=jnp.float32)
    y = jax.random.normal(k2, shape, dtype=jnp.float32)

    loss = rmse_loss(y_hat, y)
    loss = jax.block_until_ready(loss)

    ref = jnp.sqrt(jnp.mean((y_hat - y) ** 2) + 1e-8)
    assert jnp.allclose(loss, ref, rtol=1e-6, atol=1e-6), (loss, ref)

    # Secondary test: exercises the ragged row-block (in-kernel mask) path
    # (2560 elements -> 20 rows of 128, block_rows=16, 2 blocks, masked tail).
    shape2 = (2, 4, 16, 20)
    y_hat2 = jax.random.normal(k3, shape2, dtype=jnp.float32)
    y2 = jax.random.normal(k4, shape2, dtype=jnp.float32)

    loss2 = rmse_loss(y_hat2, y2)
    loss2 = jax.block_until_ready(loss2)

    ref2 = jnp.sqrt(jnp.mean((y_hat2 - y2) ** 2) + 1e-8)
    assert jnp.allclose(loss2, ref2, rtol=1e-6, atol=1e-6), (loss2, ref2)

    print("KERNEL_OK")
</pallas_src>

<mosaic_0001>
module attributes {stable_mosaic.version = 11 : i64} {
  func.func @_rmse_partial_kernel(%arg0: i32, %arg1: memref<16x128xf32, #tpu.memory_space<vmem>>, %arg2: memref<16x128xf32, #tpu.memory_space<vmem>>, %arg3: memref<1x128xf32, #tpu.memory_space<vmem>>) attributes {dimension_semantics = [#tpu.dimension_semantics<parallel>], iteration_bounds = array<i64: 1>, scalar_prefetch = 0 : i64, scratch_operands = 0 : i64, tpu.core_type = #tpu.core_type<tc>, window_params = [{transform_indices = @transform_0, window_bounds = array<i64: 16, 128>}, {transform_indices = @transform_1, window_bounds = array<i64: 16, 128>}, {transform_indices = @transform_2, window_bounds = array<i64: 1, 128>}]} {
    %c0 = arith.constant 0 : index
    %c0_0 = arith.constant 0 : index
    %0 = vector.load %arg1[%c0, %c0_0] : memref<16x128xf32, #tpu.memory_space<vmem>>, vector<16x128xf32>
    %c0_1 = arith.constant 0 : index
    %c0_2 = arith.constant 0 : index
    %1 = vector.load %arg2[%c0_1, %c0_2] : memref<16x128xf32, #tpu.memory_space<vmem>>, vector<16x128xf32>
    %2 = arith.subf %0, %1 : vector<16x128xf32>
    %3 = arith.mulf %2, %2 : vector<16x128xf32>
    %cst = arith.constant dense<0.000000e+00> : vector<128xf32>
    %4 = vector.multi_reduction <add>, %3, %cst [0] : vector<16x128xf32> to vector<128xf32>
    %5 = vector.shape_cast %4 : vector<128xf32> to vector<1x128xf32>
    %c0_3 = arith.constant 0 : index
    %c0_4 = arith.constant 0 : index
    %6 = vector.load %arg3[%c0_3, %c0_4] : memref<1x128xf32, #tpu.memory_space<vmem>>, vector<1x128xf32>
    tpu.vector_store %arg3[%c0_3, %c0_4], %5 {strides = array<i32>} : memref<1x128xf32, #tpu.memory_space<vmem>>, vector<1x128xf32>,
    return
  }
  func.func @transform_0(%arg0: i32) -> (i32, i32) {
    %c0_i32 = arith.constant 0 : i32
    %c0_i32_0 = arith.constant 0 : i32
    return %arg0, %c0_i32 : i32, i32
  }
  func.func @transform_1(%arg0: i32) -> (i32, i32) {
    %c0_i32 = arith.constant 0 : i32
    %c0_i32_0 = arith.constant 0 : i32
    return %arg0, %c0_i32 : i32, i32
  }
  func.func @transform_2(%arg0: i32) -> (i32, i32) {
    %c0_i32 = arith.constant 0 : i32
    %c0_i32_0 = arith.constant 0 : i32
    return %arg0, %c0_i32 : i32, i32
  }
}

</mosaic_0001>

<llo_original>
// kernel: tpu_custom_call.1
$region0: #{tpu_custom_call.1}
  #allocation0 [shape = 'u32[]', space=smem, size = 0x4, offset = 0x4, fixed_abs, tag = 'smem constant byte address 0x4 - core index']
  #allocation1 [shape = 'u32[72,128]{1,0:T(1,128)}', space=vmem, size = 0x9000, scoped, tag = 'internal scratch']
  %s0 = inlined_call_operand.hbm [shape: f32[16,128], index: 0, kind: input, shape index: {}]
  %s1 = inlined_call_operand.hbm [shape: f32[16,128], index: 1, kind: input, shape index: {}]
  %s2 = inlined_call_operand.hbm [shape: f32[1,128], index: 2, kind: output, shape index: {}]
  %s3 = sld [smem:[#allocation0]]
  $region26: #{tpu_custom_call.1} parent=0
    _
  %s5 = ssub.s32 1, %s3
  %s6 = scalar_select 0, %s5, %s3
  $region1: #{tpu_custom_call.1} parent=0
    #allocation2 [shape = 'u8[8192]{0}', space=vmem, size = 0x2000, scoped, tag = 'input window, operand 0, single buffered']
    #allocation3 [shape = 's32[1]{0}', space=sflag, size = 0x4, scoped, tag = 'scoped memory for tpu_custom_call.1']
    #allocation4 [shape = 's32[1]{0}', space=sflag, size = 0x4, scoped, tag = 'scoped memory for tpu_custom_call.1']
    #allocation5 [shape = 'u8[8192]{0}', space=vmem, size = 0x2000, scoped, tag = 'input window, operand 1, single buffered']
    #allocation6 [shape = 's32[1]{0}', space=sflag, size = 0x4, scoped, tag = 'scoped memory for tpu_custom_call.1']
    #allocation7 [shape = 'u8[512]{0}', space=vmem, size = 0x400, scoped, tag = 'output window, operand 0, single buffered']
    %7 = vsyncpa [#allocation3], 0
    %8 = vsyncpa [#allocation6], 0
    %9 = vsyncpa [#allocation4], 0
    // Predicated region
    $region2: #{tpu_custom_call.1} parent=1 // pred_check
      _
    $region3: #{tpu_custom_call.1} parent=1 // pred_check_branch
      %11 = sbr.rel (0) target = $region5
    $region4: #{tpu_custom_call.1} parent=1 // pred_region
      %13 = vsyncadd [#allocation3], 0
      %s14 = sshll.u32 %s0, 4
      %s15 = int_to_ptr.hbm [resolvable:$true] %s14
      %s16 = sshll.u32 [#allocation2], 4
      %s17 = int_to_ptr.vmem [resolvable:$true] %s16
      %22 = dma.hbm_to_vmem [thread:$0]  %s15, 256, %s17, [#allocation3], 128, 128, 8
    $region5: #{tpu_custom_call.1} parent=1 // pred_fallthru
      _
    // Predicated region
    $region6: #{tpu_custom_call.1} parent=1 // pred_check
      _
    $region7: #{tpu_custom_call.1} parent=1 // pred_check_branch
      %24 = sbr.rel (0) target = $region9
    $region8: #{tpu_custom_call.1} parent=1 // pred_region
      %26 = vsyncadd [#allocation6], 0
      %s27 = sshll.u32 %s1, 4
      %s28 = int_to_ptr.hbm [resolvable:$true] %s27
      %s29 = sshll.u32 [#allocation5], 4
      %s30 = int_to_ptr.vmem [resolvable:$true] %s29
      %35 = dma.hbm_to_vmem [thread:$0]  %s28, 256, %s30, [#allocation6], 128, 128, 8
    $region9: #{tpu_custom_call.1} parent=1 // pred_fallthru
      _
    // Predicated region
    $region10: #{tpu_custom_call.1} parent=1 // pred_check
      _
    $region11: #{tpu_custom_call.1} parent=1 // pred_check_branch
      %37 = sbr.rel (0) target = $region13
    $region12: #{tpu_custom_call.1} parent=1 // pred_region
      %39 = dma.done [#allocation3], 256
    $region13: #{tpu_custom_call.1} parent=1 // pred_fallthru
      _
    // Predicated region
    $region14: #{tpu_custom_call.1} parent=1 // pred_check
      _
    $region15: #{tpu_custom_call.1} parent=1 // pred_check_branch
      %41 = sbr.rel (0) target = $region17
    $region16: #{tpu_custom_call.1} parent=1 // pred_region
      %43 = dma.done [#allocation6], 256
    $region17: #{tpu_custom_call.1} parent=1 // pred_fallthru
      _
    %v44 = vld [vmem:[#allocation2] sm:$0xff]
    %v45 = vld [vmem:[#allocation2 + $0x8] sm:$0xff]
    %v46 = vld [vmem:[#allocation5] sm:$0xff]
    %v47 = vld [vmem:[#allocation5 + $0x8] sm:$0xff]
    %v48 = vsub.f32 %v44, %v46
    %v49 = vsub.f32 %v45, %v47
    %v50 = vmul.f32 %v48, %v48
    %v51 = vmul.f32 %v49, %v49
    %v52 = vadd.f32 %v50, %v51
    %v53 = vrot.slane %v52, 4
    %v54 = vadd.f32 %v52, %v53
    %v55 = vrot.slane %v54, 2
    %v56 = vadd.f32 %v54, %v55
    %v57 = vrot.slane %v56, 1
    %v58 = vadd.f32 %v56, %v57
    %59 = vst [vmem:[#allocation7] sm:$0x1] %v58
    // Predicated region
    $region18: #{tpu_custom_call.1} parent=1 // pred_check
      _
    $region19: #{tpu_custom_call.1} parent=1 // pred_check_branch
      %61 = sbr.rel (0) target = $region21
    $region20: #{tpu_custom_call.1} parent=1 // pred_region
      %63 = vsyncadd [#allocation4], 0
      %s65 = sshll.u32 [#allocation7], 4
      %s66 = int_to_ptr.vmem [resolvable:$true] %s65
      %s67 = sshll.u32 %s2, 4
      %s68 = int_to_ptr.hbm [resolvable:$true] %s67
      %70 = dma.vmem_to_hbm [thread:$0]  %s66, 16, %s68, [#allocation4]
    $region21: #{tpu_custom_call.1} parent=1 // pred_fallthru
      _
    // Predicated region
    $region22: #{tpu_custom_call.1} parent=1 // pred_check
      _
    $region23: #{tpu_custom_call.1} parent=1 // pred_check_branch
      %72 = sbr.rel (0) target = $region25
    $region24: #{tpu_custom_call.1} parent=1 // pred_region
      %74 = dma.done [#allocation4], 16
    $region25: #{tpu_custom_call.1} parent=1 // pred_fallthru
      _
    %75 = vsyncpa [#allocation3], 1
    %76 = vsyncpa [#allocation6], 1
    %77 = vsyncpa [#allocation4], 1

</llo_original>
